<compile_context>
chip_gen: v5e
topology: v5e:2x2
jax: 0.10.0
libtpu: 0.0.40
codegen_flags: <defaults>
</compile_context>

<pallas_src>
import math
import functools

import jax
import jax.numpy as jnp
from jax.experimental import pallas as pl
from jax.experimental.pallas import tpu as pltpu


def _round_up(v, mult):
    return ((v + mult - 1) // mult) * mult


def _pow_t(u, t):
    # PyTorch .pow(t); integer_pow when t is integral (cheaper + exact).
    if float(t).is_integer():
        return jax.lax.integer_pow(u, int(t))
    return u ** t


def _acos_poly(x):
    # acos(x) for |x| <= 1, |err| ~ 2e-8 (Abramowitz & Stegun style polynomial).
    # Runs only on (TILE_B, 1) values; avoids relying on an arccos lowering.
    a = jnp.abs(x)
    p = jnp.float32(-0.0012624911)
    p = p * a + 0.0066700901
    p = p * a - 0.0170881256
    p = p * a + 0.0308918810
    p = p * a - 0.0501743046
    p = p * a + 0.0889789874
    p = p * a - 0.2145988016
    p = p * a + 1.5707963050
    r_ = jnp.sqrt(jnp.maximum(1.0 - a, 0.0)) * p
    return jnp.where(x < 0.0, math.pi - r_, r_)


def _cos_0_pi(theta):
    # cos on [0, pi] via cos(t) = -sin(t - pi/2) with an odd Taylor polynomial
    # on [-pi/2, pi/2] (|err| < 1e-5).  Runs only on (TILE_B, 1) values.
    u = theta - (math.pi / 2.0)
    u2 = u * u
    s = u * (1.0 + u2 * (-1.0 / 6.0 + u2 * (1.0 / 120.0
                                            + u2 * (-1.0 / 5040.0
                                                    + u2 * (1.0 / 362880.0)))))
    return -s


def _sphereface2_kernel(x_ref, w_ref, y_ref, b_ref, out_ref, xn_ref, *,
                        alpha, r, m, t, lw, num_class,
                        tile_b, tile_c, nb, nc_split, magn_type):
    p = pl.program_id(0)          # class-split index  ("parallel")
    j = pl.program_id(2)          # class-tile index   ("arbitrary", innermost)

    # ---- once per (split, batch tile): normalized bf16 x + zeroed slab ------
    @pl.when(j == 0)
    def _():
        xf = x_ref[...].astype(jnp.float32)                       # (TB, D)
        row_ss = jnp.sum(xf * xf, axis=1, keepdims=True)          # (TB, 1)
        inv = jax.lax.rsqrt(jnp.maximum(row_ss, 1e-24))           # 1/max(||x||,1e-12)
        xn_ref[...] = (xf * inv).astype(jnp.bfloat16)
        out_ref[...] = jnp.zeros_like(out_ref)

    # ---- cosine similarities: both operands pre-normalized -> cos == dots ---
    cos = jnp.dot(xn_ref[...], w_ref[...],
                  preferred_element_type=jnp.float32)             # (TB, TC) f32

    b = b_ref[0]
    w_pos = lw * num_class / r * alpha
    w_neg = lw * num_class / r * (1.0 - alpha)

    # ---- uniform "every column is a negative" pass (no per-element selects) -
    if magn_type == 'C':
        g_all = 2.0 * _pow_t((cos + 1.0) * 0.5, t) - 1.0 + m
    elif magn_type in ('A', 'M'):
        # non-target columns: cos(clip(acos(clip(c)))) == clip(c)
        c_cl = jnp.clip(cos, -1.0 + 1e-05, 1.0 - 1e-05)
        g_all = 2.0 * _pow_t((c_cl + 1.0) * 0.5, t) - 1.0
    else:
        raise NotImplementedError(magn_type)
    l_all = r * g_all + b
    per_elem = w_neg * (jnp.maximum(l_all, 0.0)
                        + jnp.log1p(jnp.exp(-jnp.abs(l_all))))    # BCE, label 0

    # ---- lane-group tree reduction -> (TB, 128) partial slab -----------------
    groups = [per_elem[:, k * 128:(k + 1) * 128] for k in range(tile_c // 128)]
    while len(groups) > 1:
        nxt = [groups[k] + groups[k + 1] for k in range(0, len(groups) - 1, 2)]
        if len(groups) % 2:
            nxt.append(groups[-1])
        groups = nxt
    partial = groups[0]

    # ---- per-row target correction (runs on (TB,1), not (TB,TC)) ------------
    col0 = (p * nc_split + j) * tile_c
    y = y_ref[...]                                                # (TB,1); -1 on pad rows
    col_ids = jax.lax.broadcasted_iota(jnp.int32, (1, tile_c), 1) + col0
    mask = col_ids == y
    c_y = jnp.sum(jnp.where(mask, cos, 0.0), axis=1, keepdims=True)   # target cos
    has_t = jnp.logical_and(y >= col0, y < col0 + tile_c)

    if magn_type == 'C':
        base = 2.0 * _pow_t((c_y + 1.0) * 0.5, t) - 1.0
        g_n = base + m                       # what the uniform pass used there
        g_p = base - m                       # the true target value
    else:
        cc = jnp.clip(c_y, -1.0 + 1e-05, 1.0 - 1e-05)
        g_n = 2.0 * _pow_t((cc + 1.0) * 0.5, t) - 1.0
        if magn_type == 'A':
            # cos(clip(acos(c)+m, 1e-5, 3.14159)) in closed form
            sin_y = jnp.sqrt(jnp.maximum(1.0 - cc * cc, 0.0))
            g_un = cc * math.cos(m) - sin_y * math.sin(m)
            clip_thr = math.cos(3.14159 - m) if m <= 3.14159 else 2.0
            g_in = jnp.where(cc < clip_thr, math.cos(3.14159), g_un)
        else:  # 'M'
            theta = _acos_poly(cc)
            theta_m = jnp.clip(theta * m, 1e-05, 3.14159)
            g_in = _cos_0_pi(theta_m)
        g_p = 2.0 * _pow_t((g_in + 1.0) * 0.5, t) - 1.0

    l_n = r * g_n + b
    l_p = r * g_p + b
    bce_n = jnp.maximum(l_n, 0.0) + jnp.log1p(jnp.exp(-jnp.abs(l_n)))        # label 0
    bce_p = jnp.maximum(l_p, 0.0) - l_p + jnp.log1p(jnp.exp(-jnp.abs(l_p)))  # label 1
    delta = jnp.where(has_t, w_pos * bce_p - w_neg * bce_n, 0.0)             # (TB,1)

    lane0 = jax.lax.broadcasted_iota(jnp.int32, (tile_b, 128), 1) == 0
    out_ref[...] += partial + jnp.where(lane0, delta, 0.0)


def _vmem_limit_bytes():
    # <=48 MiB on 64-MiB v7x; up to 96 MiB on 128-MiB v5e/v6e.
    limit = 48 * 1024 * 1024
    try:
        cap = getattr(pltpu.get_tpu_info(), "vmem_capacity_bytes", None)
        if cap:
            limit = int(min(96 * 1024 * 1024,
                            max(32 * 1024 * 1024, (cap * 3) // 4)))
    except Exception:
        pass
    return limit


def _pick_tile_c(d_pad, tile_b, c_need, vmem_limit):
    """Class-tile width: multiple of 128, sized so the double-buffered bf16 W
    tile plus ~10 live (tile_b, tile_c) f32 rows fit the scoped VMEM budget."""
    budget = (vmem_limit * 3) // 4
    fixed = tile_b * d_pad * (2 * 4 + 2) + 2 * tile_b * 128 * 4 + 64 * 1024
    per_col = 2 * 2 * d_pad + 10 * 4 * tile_b
    avail = max(budget - fixed, per_col * 128)
    tc = (avail // per_col) // 128 * 128
    tc = max(128, min(int(tc), 2048))
    return int(min(tc, _round_up(c_need, 128)))


def sphereface2_loss(x, y, w, b, *, alpha=0.7, r=40.0, m=0.4, t=3.0, lw=50.0,
                     magn_type='C', tile_b=None, tile_c=None):
    if magn_type not in ('C', 'A', 'M'):
        raise NotImplementedError(magn_type)
    batch, feat_dim = x.shape
    assert w.shape[0] == feat_dim
    num_class = w.shape[1]

    vmem_limit = _vmem_limit_bytes()

    if tile_b is None:
        # Large resident batch tile: W is streamed from HBM ceil(B/tile_b)
        # times, so covering the whole batch (<=256 rows) reads W exactly once.
        tile_b = min(_round_up(batch, 8), 256)
    assert tile_b % 8 == 0
    d_pad = _round_up(feat_dim, 128)
    if tile_c is None:
        tile_c = _pick_tile_c(d_pad, tile_b, num_class, vmem_limit)
        # If there is only one batch tile, prefer >=2 class tiles so the
        # leading "parallel" class-split axis can feed both v7x TensorCores.
        if batch <= tile_b and tile_c >= 256 and tile_c >= _round_up(num_class, 128):
            tile_c = _round_up(num_class, 256) // 2
    assert tile_c % 128 == 0

    b_pad = _round_up(batch, tile_b)
    c_pad = _round_up(num_class, tile_c)
    nb, nc = b_pad // tile_b, c_pad // tile_c
    n_split = 2 if (nc % 2 == 0 and nc >= 2) else 1
    nc_split = nc // n_split

    # ---- wrapper-side preprocessing ------------------------------------------
    # W: column L2-normalize in f32 (the module's in-place F.normalize), cast to
    # bf16 and pad in one fused pass; the pad copy is skipped when already
    # aligned.  (For training, keep W stored pre-normalized bf16 across steps.)
    wf = w.astype(jnp.float32)
    col_norm = jnp.sqrt(jnp.sum(wf * wf, axis=0, keepdims=True))
    w_n = (wf / jnp.maximum(col_norm, 1e-12)).astype(jnp.bfloat16)
    if d_pad == feat_dim and c_pad == num_class:
        w_p = w_n
    else:
        w_p = jnp.zeros((d_pad, c_pad), jnp.bfloat16).at[:feat_dim, :num_class].set(w_n)

    if b_pad == batch and d_pad == feat_dim:
        x_p = x
    else:
        x_p = jnp.zeros((b_pad, d_pad), x.dtype).at[:batch, :feat_dim].set(x)
    y_p = jnp.full((b_pad, 1), -1, jnp.int32).at[:batch, 0].set(y.astype(jnp.int32))
    b_p = jnp.asarray(b, jnp.float32).reshape((1,))

    kernel = functools.partial(
        _sphereface2_kernel,
        alpha=float(alpha), r=float(r), m=float(m), t=float(t), lw=float(lw),
        num_class=num_class, tile_b=tile_b, tile_c=tile_c,
        nb=nb, nc_split=nc_split, magn_type=magn_type)

    grid_spec = pltpu.PrefetchScalarGridSpec(
        num_scalar_prefetch=0,
        grid=(n_split, nb, nc_split),
        in_specs=[
            pl.BlockSpec((tile_b, d_pad), lambda p, i, j: (i, 0)),              # x (resident)
            pl.BlockSpec((d_pad, tile_c), lambda p, i, j: (0, p * nc_split + j)),  # w (streamed)
            pl.BlockSpec((tile_b, 1), lambda p, i, j: (i, 0)),                  # y
            pl.BlockSpec(memory_space=pltpu.MemorySpace.SMEM),                  # b (scalar)
        ],
        out_specs=pl.BlockSpec((tile_b, 128), lambda p, i, j: (p * nb + i, 0)),
        scratch_shapes=[pltpu.VMEM((tile_b, d_pad), jnp.bfloat16)],             # normalized x
    )

    partials = pl.pallas_call(
        kernel,
        out_shape=jax.ShapeDtypeStruct((n_split * nb * tile_b, 128), jnp.float32),
        grid_spec=grid_spec,
        compiler_params=pltpu.CompilerParams(
            dimension_semantics=("parallel", "parallel", "arbitrary"),
            vmem_limit_bytes=vmem_limit),
    )(x_p, w_p, y_p, b_p)

    total = jnp.sum(partials)

    # Padded rows / columns are exact zeros after normalization, so every padded
    # element contributed the same constant w_neg * bce(r*g(0)+b); subtract it
    # analytically instead of masking inside the kernel.
    pad_elems = b_pad * c_pad - batch * num_class
    if pad_elems:
        zero = jnp.float32(0.0)
        if magn_type == 'C':
            g0 = 2.0 * _pow_t((zero + 1.0) * 0.5, t) - 1.0 + m
        else:
            c0 = jnp.clip(zero, -1.0 + 1e-05, 1.0 - 1e-05)
            g0 = 2.0 * _pow_t((c0 + 1.0) * 0.5, t) - 1.0
        l0 = r * g0 + b_p[0]
        bce0 = jnp.maximum(l0, 0.0) + jnp.log1p(jnp.exp(-jnp.abs(l0)))
        w_neg = lw * num_class / r * (1.0 - alpha)
        total = total - pad_elems * (w_neg * bce0)

    return total / (batch * num_class)


def _reference_loss(x, y, w, b, *, alpha, r, m, t, lw, num_class, magn_type):
    """Pure-JAX f32 reference mirroring the PyTorch forward."""
    xf = x.astype(jnp.float32)
    wf = w.astype(jnp.float32)
    x_n = xf / jnp.maximum(jnp.linalg.norm(xf, axis=1, keepdims=True), 1e-12)
    w_n = wf / jnp.maximum(jnp.linalg.norm(wf, axis=0, keepdims=True), 1e-12)
    cos_theta = x_n @ w_n
    one_hot = jax.nn.one_hot(y, num_class, dtype=jnp.float32)
    if magn_type == 'C':
        g = 2.0 * ((cos_theta + 1.0) / 2.0) ** t - 1.0
        g = g - m * (2.0 * one_hot - 1.0)
    elif magn_type == 'A':
        theta_m = jnp.arccos(jnp.clip(cos_theta, -1.0 + 1e-05, 1.0 - 1e-05))
        theta_m = theta_m + m * one_hot
        theta_m = jnp.clip(theta_m, 1e-05, 3.14159)
        g = 2.0 * ((jnp.cos(theta_m) + 1.0) / 2.0) ** t - 1.0
    elif magn_type == 'M':
        m_theta = jnp.arccos(jnp.clip(cos_theta, -1.0 + 1e-05, 1.0 - 1e-05))
        m_theta = jnp.where(one_hot > 0, m_theta * m, m_theta)
        m_theta = jnp.clip(m_theta, 1e-05, 3.14159)
        g = 2.0 * ((jnp.cos(m_theta) + 1.0) / 2.0) ** t - 1.0
    else:
        raise NotImplementedError(magn_type)
    logits = r * g + b[0]
    weight = (lw * num_class / r) * (alpha * one_hot + (1.0 - alpha) * (1.0 - one_hot))
    per = weight * (jnp.maximum(logits, 0.0) - logits * one_hot
                    + jnp.log1p(jnp.exp(-jnp.abs(logits))))
    return jnp.mean(per)


def _init_bias(magn_type, num_class, alpha, r, m, t):
    # deterministic bias init exactly as in SphereFace2.__init__
    z = alpha / ((1.0 - alpha) * (num_class - 1.0))
    if magn_type == 'C':
        ay = r * (2.0 * 0.5 ** t - 1.0 - m)
        ai = r * (2.0 * 0.5 ** t - 1.0 + m)
    elif magn_type == 'A':
        theta_y = min(math.pi, math.pi / 2.0 + m)
        ay = r * (2.0 * ((math.cos(theta_y) + 1.0) / 2.0) ** t - 1.0)
        ai = r * (2.0 * 0.5 ** t - 1.0)
    elif magn_type == 'M':
        theta_y = min(math.pi, m * math.pi / 2.0)
        ay = r * (2.0 * ((math.cos(theta_y) + 1.0) / 2.0) ** t - 1.0)
        ai = r * (2.0 * 0.5 ** t - 1.0)
    else:
        raise NotImplementedError(magn_type)
    temp = (1.0 - z) ** 2 + 4.0 * z * math.exp(ay - ai)
    b0 = math.log(2.0 * z) - ai - math.log(1.0 - z + math.sqrt(temp))
    return jnp.array([b0], jnp.float32)


if __name__ == "__main__":
    alpha, r, m, t, lw = 0.7, 40.0, 0.4, 3.0, 50.0
    key = jax.random.PRNGKey(0)

    configs = [
        # single-tile path (module defaults at small shapes)
        dict(batch=8, feat_dim=32, num_class=128, tile_b=None, tile_c=None,
             magn_types=('C',)),
        # multi-tile path: padded batch + class axes, all three margin types
        dict(batch=20, feat_dim=72, num_class=300, tile_b=16, tile_c=128,
             magn_types=('C', 'A', 'M')),
        # even class-tile count -> exercises the 2-way "parallel" class split
        dict(batch=12, feat_dim=64, num_class=512, tile_b=None, tile_c=128,
             magn_types=('C',)),
    ]

    for cfg in configs:
        batch, feat_dim, num_class = cfg['batch'], cfg['feat_dim'], cfg['num_class']
        kx, kw, ky, key = jax.random.split(key, 4)
        x = jax.random.normal(kx, (batch, feat_dim), jnp.float32)
        y = jax.random.randint(ky, (batch,), 0, num_class, jnp.int32)
        # nn.init.xavier_normal_ on a (feat_dim, num_class) tensor
        std = math.sqrt(2.0 / (feat_dim + num_class))
        w = std * jax.random.normal(kw, (feat_dim, num_class), jnp.float32)

        for magn_type in cfg['magn_types']:
            b = _init_bias(magn_type, num_class, alpha, r, m, t)
            loss = sphereface2_loss(
                x, y, w, b, alpha=alpha, r=r, m=m, t=t, lw=lw,
                magn_type=magn_type, tile_b=cfg['tile_b'], tile_c=cfg['tile_c'])
            jax.block_until_ready(loss)
            ref = _reference_loss(x, y, w, b, alpha=alpha, r=r, m=m, t=t, lw=lw,
                                  num_class=num_class, magn_type=magn_type)
            assert bool(jnp.isfinite(loss)), (magn_type, loss)
            assert bool(jnp.allclose(loss, ref, rtol=3e-2, atol=3e-2)), \
                (magn_type, float(loss), float(ref))

    print("KERNEL_OK")
</pallas_src>

<mosaic_0001>
module attributes {stable_mosaic.version = 11 : i64} {
  func.func @_sphereface2_kernel(%arg0: i32, %arg1: i32, %arg2: i32, %arg3: memref<8x128xf32, #tpu.memory_space<vmem>>, %arg4: memref<128x128xbf16, #tpu.memory_space<vmem>>, %arg5: memref<8x1xi32, #tpu.memory_space<vmem>>, %arg6: memref<1xf32, #tpu.memory_space<smem>>, %arg7: memref<8x128xf32, #tpu.memory_space<vmem>>, %arg8: memref<8x128xbf16, #tpu.memory_space<vmem>>) attributes {dimension_semantics = [#tpu.dimension_semantics<parallel>, #tpu.dimension_semantics<parallel>, #tpu.dimension_semantics<arbitrary>], iteration_bounds = array<i64: 1, 1, 1>, scalar_prefetch = 0 : i64, scratch_operands = 1 : i64, tpu.core_type = #tpu.core_type<tc>, window_params = [{transform_indices = @transform_0, window_bounds = array<i64: 8, 128>}, {transform_indices = @transform_1, window_bounds = array<i64: 128, 128>}, {transform_indices = @transform_2, window_bounds = array<i64: 8, 1>}, {transform_indices = @transform_3, window_bounds = array<i64: 1>}, {transform_indices = @transform_4, window_bounds = array<i64: 8, 128>}]} {
    %c0_i32 = arith.constant 0 : i32
    %0 = arith.cmpi eq, %arg2, %c0_i32 : i32
    %1 = arith.extui %0 : i1 to i32
    %c0_i32_0 = arith.constant 0 : i32
    %2 = arith.cmpi ne, %1, %c0_i32_0 : i32
    scf.if %2 {
      %c0_40 = arith.constant 0 : index
      %c0_41 = arith.constant 0 : index
      %110 = vector.load %arg3[%c0_40, %c0_41] : memref<8x128xf32, #tpu.memory_space<vmem>>, vector<8x128xf32>
      %111 = arith.mulf %110, %110 : vector<8x128xf32>
      %cst_42 = arith.constant dense<0.000000e+00> : vector<8xf32>
      %112 = vector.multi_reduction <add>, %111, %cst_42 [1] : vector<8x128xf32> to vector<8xf32>
      %113 = vector.shape_cast %112 : vector<8xf32> to vector<8x1xf32>
      %cst_43 = arith.constant 1.000000e-24 : f32
      %114 = vector.broadcast %cst_43 : f32 to vector<8x1xf32>
      %115 = arith.maximumf %113, %114 : vector<8x1xf32>
      %116 = math.rsqrt %115 : vector<8x1xf32>
      %117 = vector.broadcast %116 : vector<8x1xf32> to vector<8x128xf32>
      %118 = arith.mulf %110, %117 : vector<8x128xf32>
      %119 = arith.truncf %118 : vector<8x128xf32> to vector<8x128xbf16>
      %c0_44 = arith.constant 0 : index
      %c0_45 = arith.constant 0 : index
      %120 = vector.load %arg8[%c0_44, %c0_45] : memref<8x128xbf16, #tpu.memory_space<vmem>>, vector<8x128xbf16>
      tpu.vector_store %arg8[%c0_44, %c0_45], %119 {strides = array<i32>} : memref<8x128xbf16, #tpu.memory_space<vmem>>, vector<8x128xbf16>,
      %cst_46 = arith.constant 0.000000e+00 : f32
      %121 = vector.broadcast %cst_46 : f32 to vector<8x128xf32>
      %c0_47 = arith.constant 0 : index
      %c0_48 = arith.constant 0 : index
      %122 = vector.load %arg7[%c0_47, %c0_48] : memref<8x128xf32, #tpu.memory_space<vmem>>, vector<8x128xf32>
      tpu.vector_store %arg7[%c0_47, %c0_48], %121 {strides = array<i32>} : memref<8x128xf32, #tpu.memory_space<vmem>>, vector<8x128xf32>,
    } else {
    }
    %c0 = arith.constant 0 : index
    %c0_1 = arith.constant 0 : index
    %3 = vector.load %arg8[%c0, %c0_1] : memref<8x128xbf16, #tpu.memory_space<vmem>>, vector<8x128xbf16>
    %c0_2 = arith.constant 0 : index
    %c0_3 = arith.constant 0 : index
    %4 = vector.load %arg4[%c0_2, %c0_3] : memref<128x128xbf16, #tpu.memory_space<vmem>>, vector<128x128xbf16>
    %cst = arith.constant dense<0.000000e+00> : vector<8x128xf32>
    %5 = tpu.matmul %3, %4, %cst {dimension_numbers = #tpu.dot_dimension_numbers<[1], [0], [0], [1], [0, 0, 1, 1], [], []>} : vector<8x128xbf16>, vector<128x128xbf16>, vector<8x128xf32> -> vector<8x128xf32>
    %c0_4 = arith.constant 0 : index
    %6 = memref.load %arg6[%c0_4] : memref<1xf32, #tpu.memory_space<smem>>
    %cst_5 = arith.constant 1.000000e+00 : f32
    %7 = vector.broadcast %cst_5 : f32 to vector<8x128xf32>
    %8 = arith.addf %5, %7 : vector<8x128xf32>
    %cst_6 = arith.constant 5.000000e-01 : f32
    %9 = vector.broadcast %cst_6 : f32 to vector<8x128xf32>
    %10 = arith.mulf %8, %9 : vector<8x128xf32>
    %11 = arith.mulf %10, %10 : vector<8x128xf32>
    %12 = arith.mulf %10, %11 : vector<8x128xf32>
    %cst_7 = arith.constant 2.000000e+00 : f32
    %13 = vector.broadcast %cst_7 : f32 to vector<8x128xf32>
    %14 = arith.mulf %13, %12 : vector<8x128xf32>
    %cst_8 = arith.constant 1.000000e+00 : f32
    %15 = vector.broadcast %cst_8 : f32 to vector<8x128xf32>
    %16 = arith.subf %14, %15 : vector<8x128xf32>
    %cst_9 = arith.constant 4.000000e-01 : f32
    %17 = vector.broadcast %cst_9 : f32 to vector<8x128xf32>
    %18 = arith.addf %16, %17 : vector<8x128xf32>
    %cst_10 = arith.constant 4.000000e+01 : f32
    %19 = vector.broadcast %cst_10 : f32 to vector<8x128xf32>
    %20 = arith.mulf %19, %18 : vector<8x128xf32>
    %21 = vector.broadcast %6 : f32 to vector<8x128xf32>
    %22 = arith.addf %20, %21 : vector<8x128xf32>
    %cst_11 = arith.constant 0.000000e+00 : f32
    %23 = vector.broadcast %cst_11 : f32 to vector<8x128xf32>
    %24 = arith.maximumf %22, %23 : vector<8x128xf32>
    %25 = math.absf %22 : vector<8x128xf32>
    %cst_12 = arith.constant 0.000000e+00 : f32
    %26 = vector.broadcast %cst_12 : f32 to vector<8x128xf32>
    %27 = arith.subf %26, %25 : vector<8x128xf32>
    %28 = math.exp %27 : vector<8x128xf32>
    %29 = math.log1p %28 : vector<8x128xf32>
    %30 = arith.addf %24, %29 : vector<8x128xf32>
    %cst_13 = arith.constant 4.800000e+01 : f32
    %31 = vector.broadcast %cst_13 : f32 to vector<8x128xf32>
    %32 = arith.mulf %31, %30 : vector<8x128xf32>
    %c1_i32 = arith.constant 1 : i32
    %33 = arith.muli %arg0, %c1_i32 : i32
    %34 = arith.addi %33, %arg2 : i32
    %c128_i32 = arith.constant 128 : i32
    %35 = arith.muli %34, %c128_i32 : i32
    %c0_14 = arith.constant 0 : index
    %c0_15 = arith.constant 0 : index
    %36 = vector.load %arg5[%c0_14, %c0_15] : memref<8x1xi32, #tpu.memory_space<vmem>>, vector<8x1xi32>
    %37 = tpu.iota {dimensions = array<i32: 1>} : vector<1x128xi32>
    %38 = vector.broadcast %35 : i32 to vector<1x128xi32>
    %39 = arith.addi %37, %38 : vector<1x128xi32>
    %40 = vector.broadcast %39 : vector<1x128xi32> to vector<8x128xi32>
    %41 = vector.broadcast %36 : vector<8x1xi32> to vector<8x128xi32>
    %42 = arith.cmpi eq, %40, %41 : vector<8x128xi32>
    %cst_16 = arith.constant 0.000000e+00 : f32
    %43 = vector.broadcast %cst_16 : f32 to vector<8x128xf32>
    %44 = arith.select %42, %5, %43 : vector<8x128xi1>, vector<8x128xf32>
    %cst_17 = arith.constant dense<0.000000e+00> : vector<8xf32>
    %45 = vector.multi_reduction <add>, %44, %cst_17 [1] : vector<8x128xf32> to vector<8xf32>
    %46 = vector.shape_cast %45 : vector<8xf32> to vector<8x1xf32>
    %47 = vector.broadcast %35 : i32 to vector<8x1xi32>
    %48 = arith.cmpi sge, %36, %47 : vector<8x1xi32>
    %c128_i32_18 = arith.constant 128 : i32
    %49 = arith.addi %35, %c128_i32_18 : i32
    %50 = vector.broadcast %49 : i32 to vector<8x1xi32>
    %51 = arith.cmpi slt, %36, %50 : vector<8x1xi32>
    %52 = arith.andi %48, %51 : vector<8x1xi1>
    %cst_19 = arith.constant 1.000000e+00 : f32
    %53 = vector.broadcast %cst_19 : f32 to vector<8x1xf32>
    %54 = arith.addf %46, %53 : vector<8x1xf32>
    %cst_20 = arith.constant 5.000000e-01 : f32
    %55 = vector.broadcast %cst_20 : f32 to vector<8x1xf32>
    %56 = arith.mulf %54, %55 : vector<8x1xf32>
    %57 = arith.mulf %56, %56 : vector<8x1xf32>
    %58 = arith.mulf %56, %57 : vector<8x1xf32>
    %cst_21 = arith.constant 2.000000e+00 : f32
    %59 = vector.broadcast %cst_21 : f32 to vector<8x1xf32>
    %60 = arith.mulf %59, %58 : vector<8x1xf32>
    %cst_22 = arith.constant 1.000000e+00 : f32
    %61 = vector.broadcast %cst_22 : f32 to vector<8x1xf32>
    %62 = arith.subf %60, %61 : vector<8x1xf32>
    %cst_23 = arith.constant 4.000000e-01 : f32
    %63 = vector.broadcast %cst_23 : f32 to vector<8x1xf32>
    %64 = arith.addf %62, %63 : vector<8x1xf32>
    %cst_24 = arith.constant 4.000000e-01 : f32
    %65 = vector.broadcast %cst_24 : f32 to vector<8x1xf32>
    %66 = arith.subf %62, %65 : vector<8x1xf32>
    %cst_25 = arith.constant 4.000000e+01 : f32
    %67 = vector.broadcast %cst_25 : f32 to vector<8x1xf32>
    %68 = arith.mulf %67, %64 : vector<8x1xf32>
    %69 = vector.broadcast %6 : f32 to vector<8x1xf32>
    %70 = arith.addf %68, %69 : vector<8x1xf32>
    %cst_26 = arith.constant 4.000000e+01 : f32
    %71 = vector.broadcast %cst_26 : f32 to vector<8x1xf32>
    %72 = arith.mulf %71, %66 : vector<8x1xf32>
    %73 = vector.broadcast %6 : f32 to vector<8x1xf32>
    %74 = arith.addf %72, %73 : vector<8x1xf32>
    %cst_27 = arith.constant 0.000000e+00 : f32
    %75 = vector.broadcast %cst_27 : f32 to vector<8x1xf32>
    %76 = arith.maximumf %70, %75 : vector<8x1xf32>
    %77 = math.absf %70 : vector<8x1xf32>
    %cst_28 = arith.constant 0.000000e+00 : f32
    %78 = vector.broadcast %cst_28 : f32 to vector<8x1xf32>
    %79 = arith.subf %78, %77 : vector<8x1xf32>
    %80 = math.exp %79 : vector<8x1xf32>
    %81 = math.log1p %80 : vector<8x1xf32>
    %82 = arith.addf %76, %81 : vector<8x1xf32>
    %cst_29 = arith.constant 0.000000e+00 : f32
    %83 = vector.broadcast %cst_29 : f32 to vector<8x1xf32>
    %84 = arith.maximumf %74, %83 : vector<8x1xf32>
    %85 = arith.subf %84, %74 : vector<8x1xf32>
    %86 = math.absf %74 : vector<8x1xf32>
    %cst_30 = arith.constant 0.000000e+00 : f32
    %87 = vector.broadcast %cst_30 : f32 to vector<8x1xf32>
    %88 = arith.subf %87, %86 : vector<8x1xf32>
    %89 = math.exp %88 : vector<8x1xf32>
    %90 = math.log1p %89 : vector<8x1xf32>
    %91 = arith.addf %85, %90 : vector<8x1xf32>
    %cst_31 = arith.constant 1.120000e+02 : f32
    %92 = vector.broadcast %cst_31 : f32 to vector<8x1xf32>
    %93 = arith.mulf %92, %91 : vector<8x1xf32>
    %cst_32 = arith.constant 4.800000e+01 : f32
    %94 = vector.broadcast %cst_32 : f32 to vector<8x1xf32>
    %95 = arith.mulf %94, %82 : vector<8x1xf32>
    %96 = arith.subf %93, %95 : vector<8x1xf32>
    %cst_33 = arith.constant 0.000000e+00 : f32
    %97 = vector.broadcast %cst_33 : f32 to vector<8x1xf32>
    %98 = arith.select %52, %96, %97 : vector<8x1xi1>, vector<8x1xf32>
    %99 = tpu.iota {dimensions = array<i32: 1>} : vector<8x128xi32>
    %c0_i32_34 = arith.constant 0 : i32
    %100 = vector.broadcast %c0_i32_34 : i32 to vector<8x128xi32>
    %101 = arith.cmpi eq, %99, %100 : vector<8x128xi32>
    %c0_35 = arith.constant 0 : index
    %c0_36 = arith.constant 0 : index
    %102 = vector.load %arg7[%c0_35, %c0_36] : memref<8x128xf32, #tpu.memory_space<vmem>>, vector<8x128xf32>
    %cst_37 = arith.constant 0.000000e+00 : f32
    %103 = vector.shape_cast %98 : vector<8x1xf32> to vector<8x1xf32>
    %104 = vector.broadcast %103 : vector<8x1xf32> to vector<8x128xf32>
    %105 = vector.broadcast %cst_37 : f32 to vector<8x128xf32>
    %106 = arith.select %101, %104, %105 : vector<8x128xi1>, vector<8x128xf32>
    %107 = arith.addf %32, %106 : vector<8x128xf32>
    %108 = arith.addf %102, %107 : vector<8x128xf32>
    %c0_38 = arith.constant 0 : index
    %c0_39 = arith.constant 0 : index
    %109 = vector.load %arg7[%c0_38, %c0_39] : memref<8x128xf32, #tpu.memory_space<vmem>>, vector<8x128xf32>
    tpu.vector_store %arg7[%c0_38, %c0_39], %108 {strides = array<i32>} : memref<8x128xf32, #tpu.memory_space<vmem>>, vector<8x128xf32>,
    return
  }
  func.func @transform_0(%arg0: i32, %arg1: i32, %arg2: i32) -> (i32, i32) {
    %c0_i32 = arith.constant 0 : i32
    %c0_i32_0 = arith.constant 0 : i32
    return %arg1, %c0_i32 : i32, i32
  }
  func.func @transform_1(%arg0: i32, %arg1: i32, %arg2: i32) -> (i32, i32) {
    %c1_i32 = arith.constant 1 : i32
    %0 = arith.muli %arg0, %c1_i32 : i32
    %1 = arith.addi %0, %arg2 : i32
    %c0_i32 = arith.constant 0 : i32
    %c0_i32_0 = arith.constant 0 : i32
    return %c0_i32, %1 : i32, i32
  }
  func.func @transform_2(%arg0: i32, %arg1: i32, %arg2: i32) -> (i32, i32) {
    %c0_i32 = arith.constant 0 : i32
    %c0_i32_0 = arith.constant 0 : i32
    return %arg1, %c0_i32 : i32, i32
  }
  func.func @transform_3(%arg0: i32, %arg1: i32, %arg2: i32) -> i32 {
    %c0_i32 = arith.constant 0 : i32
    %c0_i32_0 = arith.constant 0 : i32
    return %c0_i32 : i32
  }
  func.func @transform_4(%arg0: i32, %arg1: i32, %arg2: i32) -> (i32, i32) {
    %c1_i32 = arith.constant 1 : i32
    %0 = arith.muli %arg0, %c1_i32 : i32
    %1 = arith.addi %0, %arg1 : i32
    %c0_i32 = arith.constant 0 : i32
    %c0_i32_0 = arith.constant 0 : i32
    return %1, %c0_i32 : i32, i32
  }
}

</mosaic_0001>

<llo_original>
// kernel: tpu_custom_call.1
$region0: #{tpu_custom_call.1}
  #allocation0 [shape = 'u32[]', space=smem, size = 0x4, offset = 0x4, fixed_abs, tag = 'smem constant byte address 0x4 - core index']
  #allocation1 [shape = 'u32[72,128]{1,0:T(1,128)}', space=vmem, size = 0x9000, scoped, tag = 'internal scratch']
  #allocation2 [shape = 'bf16[8,128]{1,0:T(8,128)(2,1)}', space=vmem, size = 0x800, scoped, tag = 'scratch operand']
  #allocation3 [shape = 'f32[1]{0:T(128)S(6)}', space=smem, size = 0x200, scoped, tag = 'scoped memory for tpu_custom_call.1']
  %s0 = inlined_call_operand.vmem [shape: f32[8,128], index: 0, kind: input, shape index: {}]
  %s1 = inlined_call_operand.hbm [shape: bf16[128,128], index: 1, kind: input, shape index: {}]
  %s2 = inlined_call_operand.vmem [shape: s32[8,1], index: 2, kind: input, shape index: {}]
  %s3 = inlined_call_operand.<no memory space> [shape: f32[1], index: 3, kind: input, shape index: {}]
  %s4 = inlined_call_operand.hbm [shape: f32[8,128], index: 4, kind: output, shape index: {}]
  %s5 = sld [smem:[#allocation0]]
  $region34: #{tpu_custom_call.1} parent=0
    _
  %s7 = ssub.s32 1, %s5
  %s8 = scalar_select 0, %s7, %s5
  %9 = sst [smem:[#allocation3]] %s3
  $region1: #{tpu_custom_call.1} parent=0
    #allocation4 [shape = 'u8[32768]{0}', space=vmem, size = 0x8000, scoped, tag = 'input window, operand 1, single buffered']
    #allocation5 [shape = 's32[1]{0}', space=sflag, size = 0x4, scoped, tag = 'scoped memory for tpu_custom_call.1']
    #allocation6 [shape = 's32[1]{0}', space=sflag, size = 0x4, scoped, tag = 'scoped memory for tpu_custom_call.1']
    #allocation7 [shape = 'u8[4096]{0}', space=vmem, size = 0x1000, scoped, tag = 'output window, operand 0, single buffered']
    %10 = vsyncpa [#allocation5], 0
    %11 = vsyncpa [#allocation6], 0
    // Predicated region
    $region2: #{tpu_custom_call.1} parent=1 // pred_check
      _
    $region3: #{tpu_custom_call.1} parent=1 // pred_check_branch
      %13 = sbr.rel (0) target = $region5
    $region4: #{tpu_custom_call.1} parent=1 // pred_region
      _
    $region5: #{tpu_custom_call.1} parent=1 // pred_fallthru
      _
    // Predicated region
    $region6: #{tpu_custom_call.1} parent=1 // pred_check
      _
    $region7: #{tpu_custom_call.1} parent=1 // pred_check_branch
      %15 = sbr.rel (0) target = $region9
    $region8: #{tpu_custom_call.1} parent=1 // pred_region
      %s16 = sadd.s32 0, 0
      %18 = vsyncadd [#allocation5], 0
      %s19 = smul.addr %s16, 4
      %s20 = scalar_lea.hbm %s1, %s19
      %s21 = sshll.u32 %s20, 4
      %s22 = int_to_ptr.hbm [resolvable:$true] %s21
      %s23 = sshll.u32 [#allocation4], 4
      %s24 = int_to_ptr.vmem [resolvable:$true] %s23
      %29 = dma.hbm_to_vmem [thread:$0]  %s22, 1024, %s24, [#allocation5], 64, 64, 4
    $region9: #{tpu_custom_call.1} parent=1 // pred_fallthru
      _
    // Predicated region
    $region10: #{tpu_custom_call.1} parent=1 // pred_check
      _
    $region11: #{tpu_custom_call.1} parent=1 // pred_check_branch
      %31 = sbr.rel (0) target = $region13
    $region12: #{tpu_custom_call.1} parent=1 // pred_region
      _
    $region13: #{tpu_custom_call.1} parent=1 // pred_fallthru
      _
    // Predicated region
    $region14: #{tpu_custom_call.1} parent=1 // pred_check
      _
    $region15: #{tpu_custom_call.1} parent=1 // pred_check_branch
      %33 = sbr.rel (0) target = $region17
    $region16: #{tpu_custom_call.1} parent=1 // pred_region
      _
    $region17: #{tpu_custom_call.1} parent=1 // pred_fallthru
      _
    // Predicated region
    $region18: #{tpu_custom_call.1} parent=1 // pred_check
      _
    $region19: #{tpu_custom_call.1} parent=1 // pred_check_branch
      %35 = sbr.rel (0) target = $region21
    $region20: #{tpu_custom_call.1} parent=1 // pred_region
      %37 = dma.done [#allocation5], 1024
    $region21: #{tpu_custom_call.1} parent=1 // pred_fallthru
      _
    %s38 = sadd.s32 0, 0
    %s39 = sadd.s32 0, 0
    %p40 = scmp.eq.s32.totalorder 0, 0
    // Predicated region
    $region22: #{tpu_custom_call.1} parent=1 // pred_check
      %p41 = pneg %p40
    $region23: #{tpu_custom_call.1} parent=1 // pred_check_branch
      %43 = sbr.rel (%p41) target = $region25
    $region24: #{tpu_custom_call.1} parent=1 // pred_region
      %v44 = vld [vmem:[%s0] sm:$0xff]
      %v45 = vmul.f32 %v44, %v44
      %46 = vadd.xlane.f32.xlu0 %v45
      %v47 = vpop.xlane.xlu0 %46
      %v48 = vmax.f32 %v47, 1e-24
      %v49 = vrsqrt.pop %v48
      %v50 = vmul.f32 %v49, %v48
      %v51 = vmul.f32 %v50, %v49
      %v52 = vmul.f32 0.5, %v51
      %v53 = vsub.f32 1.5, %v52
      %v54 = vmul.f32 %v49, %v53
      %vm55 = vweird.f32 %v48
      %vm56 = vweird.f32 %v49
      %vm57 = vmor %vm55, %vm56
      %v58 = vsel %vm57, %v49, %v54
      %v59 = vmul.f32 %v44, %v58
      %v60 = vpack.c.bf16 %v59, %v59
      %61 = vst [vmem:[#allocation2] sm:$0xf] %v60
      %62 = vst [vmem:[#allocation7] sm:$0xff] 0.0
    $region25: #{tpu_custom_call.1} parent=1 // pred_fallthru
      _
    %v63 = vld [vmem:[#allocation2] sm:$0xf]
    %v64 = vld [vmem:[#allocation4] sm:$0xf]
    %v65 = vld [vmem:[#allocation4 + $0x4] sm:$0xf]
    %v66 = vld [vmem:[#allocation4 + $0x8] sm:$0xf]
    %v67 = vld [vmem:[#allocation4 + $0xc] sm:$0xf]
    %v68 = vld [vmem:[#allocation4 + $0x10] sm:$0xf]
    %v69 = vld [vmem:[#allocation4 + $0x14] sm:$0xf]
    %v70 = vld [vmem:[#allocation4 + $0x18] sm:$0xf]
    %v71 = vld [vmem:[#allocation4 + $0x1c] sm:$0xf]
    %v72 = vld [vmem:[#allocation4 + $0x20] sm:$0xf]
    %v73 = vld [vmem:[#allocation4 + $0x24] sm:$0xf]
    %v74 = vld [vmem:[#allocation4 + $0x28] sm:$0xf]
    %v75 = vld [vmem:[#allocation4 + $0x2c] sm:$0xf]
    %v76 = vld [vmem:[#allocation4 + $0x30] sm:$0xf]
    %v77 = vld [vmem:[#allocation4 + $0x34] sm:$0xf]
    %v78 = vld [vmem:[#allocation4 + $0x38] sm:$0xf]
    %v79 = vld [vmem:[#allocation4 + $0x3c] sm:$0xf]
    %v96 = vunpack.c.l.b16 %v64
    %v97 = vunpack.c.l.b16 %v65
    %v98 = vunpack.c.l.b16 %v66
    %v99 = vunpack.c.l.b16 %v67
    %v100 = vunpack.c.l.b16 %v68
    %v101 = vunpack.c.l.b16 %v69
    %v102 = vunpack.c.l.b16 %v70
    %v103 = vunpack.c.l.b16 %v71
    %v104 = vunpack.c.l.b16 %v72
    %v105 = vunpack.c.l.b16 %v73
    %v106 = vunpack.c.l.b16 %v74
    %v107 = vunpack.c.l.b16 %v75
    %v108 = vunpack.c.l.b16 %v76
    %v109 = vunpack.c.l.b16 %v77
    %v110 = vunpack.c.l.b16 %v78
    %v111 = vunpack.c.l.b16 %v79
    %v112 = vpack.c.b16 %v97, %v96
    %v113 = vpack.c.b16 %v99, %v98
    %v114 = vpack.c.b16 %v101, %v100
    %v115 = vpack.c.b16 %v103, %v102
    %v116 = vpack.c.b16 %v105, %v104
    %v117 = vpack.c.b16 %v107, %v106
    %v118 = vpack.c.b16 %v109, %v108
    %v119 = vpack.c.b16 %v111, %v110
    %128 = vmatpush.bf16.msra.mxu0 %v119
    %129 = vmatpush.bf16.msra.mxu0 %v118
    %130 = vmatpush.bf16.msra.mxu0 %v117
    %131 = vmatpush.bf16.msra.mxu0 %v116
    %132 = vmatpush.bf16.msra.mxu0 %v115
    %133 = vmatpush.bf16.msra.mxu0 %v114
    %134 = vmatpush.bf16.msra.mxu0 %v113
    %135 = vmatpush.bf16.msra.mxu0 %v112
    %136 = vmatmul.bf16.gmra.mxu0 %v63
    %v137 = vpop.f32.mrf.mxu0
    %v138 = vadd.f32 0.0, %v137
    %v139 = vpop.f32.mrf.mxu0
    %140 = vdwg.mxu0
    %s141 = sld [smem:[#allocation3]]
    %v142 = vadd.f32 %v138, 1.0
    %v143 = vmul.f32 %v142, 0.5
    %v144 = vmul.f32 %v143, %v143
    %v145 = vmul.f32 %v143, %v144
    %v146 = vmul.f32 %v145, 2.0
    %v147 = vsub.f32 %v146, 1.0
    %v148 = vadd.f32 %v147, 0.4
    %v149 = vmul.f32 %v148, 40.0
    %v150 = vstv %s141
    %v151 = vadd.f32 %v149, %v150
    %v152 = vmax.f32 %v151, 0.0
    %v153 = vand.u32 2147483647, %v151
    %v154 = vsub.f32 0.0, %v153
    %v155 = vmul.f32 %v154, 1.442695
    %v156 = vpow.pop %v155
    %v157 = vadd.f32 %v156, 1.0
    %v158 = vlog2.pop %v157
    %v159 = vmul.f32 %v158, 0.6931472
    %v160 = vmul.f32 -0.5, %v156
    %v161 = vadd.f32 %v160, 1.0
    %v162 = vmul.f32 %v161, %v156
    %v163 = vand.u32 2147483647, %v156
    %vm164 = vcmp.lt.f32.partialorder %v163, 0.0004427343
    %v165 = vsel %vm164, %v162, %v159
    %v166 = vadd.f32 %v152, %v165
    %v167 = vmul.f32 %v166, 48.0
    %s168 = sadd.s32 0, 0
    %s169 = smul.u32 %s168, 128
    %v170 = vld [vmem:[%s2] sm:$0xff]
    %v171 = vlaneseq
    %v172 = vand.u32 %v171, 127
    %v173 = vstv %s169
    %v174 = vadd.s32 %v172, %v173
    %175 = vset.pattern.permute.xlu0 0
    %176 = vperm.xlu0 %175, %v170
    %v177 = vpop.permute.xlu0 %176
    %vm178 = vcmp.eq.s32.totalorder %v174, %v177
    %v179 = vsel %vm178, %v138, 0.0
    %180 = vadd.xlane.f32.xlu0 %v179
    %v181 = vpop.xlane.xlu0 %180
    %vm182 = vcmp.ge.s32.totalorder %v170, %v173
    %s183 = sadd.s32 %s169, 128
    %v184 = vstv %s183
    %vm185 = vcmp.lt.s32.totalorder %v170, %v184
    %vm186 = vmand %vm182, %vm185
    %v187 = vadd.f32 %v181, 1.0
    %v188 = vmul.f32 %v187, 0.5
    %v189 = vmul.f32 %v188, %v188
    %v190 = vmul.f32 %v188, %v189
    %v191 = vmul.f32 %v190, 2.0
    %v192 = vsub.f32 %v191, 1.0
    %v193 = vadd.f32 %v192, 0.4
    %v194 = vsub.f32 %v192, 0.4
    %v195 = vmul.f32 %v193, 40.0
    %v196 = vadd.f32 %v195, %v150
    %v197 = vmul.f32 %v194, 40.0
    %v198 = vadd.f32 %v197, %v150
    %v199 = vmax.f32 %v196, 0.0
    %v200 = vand.u32 2147483647, %v196
    %v201 = vsub.f32 0.0, %v200
    %v202 = vmul.f32 %v201, 1.442695
    %v203 = vpow.pop %v202
    %v204 = vadd.f32 %v203, 1.0
    %v205 = vlog2.pop %v204
    %v206 = vmul.f32 %v205, 0.6931472
    %v207 = vmul.f32 -0.5, %v203
    %v208 = vadd.f32 %v207, 1.0
    %v209 = vmul.f32 %v208, %v203
    %v210 = vand.u32 2147483647, %v203
    %vm211 = vcmp.lt.f32.partialorder %v210, 0.0004427343
    %v212 = vsel %vm211, %v209, %v206
    %v213 = vadd.f32 %v199, %v212
    %v214 = vmax.f32 %v198, 0.0
    %v215 = vsub.f32 %v214, %v198
    %v216 = vand.u32 2147483647, %v198
    %v217 = vsub.f32 0.0, %v216
    %v218 = vmul.f32 %v217, 1.442695
    %v219 = vpow.pop %v218
    %v220 = vadd.f32 %v219, 1.0
    %v221 = vlog2.pop %v220
    %v222 = vmul.f32 %v221, 0.6931472
    %v223 = vmul.f32 -0.5, %v219
    %v224 = vadd.f32 %v223, 1.0
    %v225 = vmul.f32 %v224, %v219
    %v226 = vand.u32 2147483647, %v219
    %vm227 = vcmp.lt.f32.partialorder %v226, 0.0004427343
    %v228 = vsel %vm227, %v225, %v222
    %v229 = vadd.f32 %v215, %v228
    %v230 = vmul.f32 %v229, 112.0
    %v231 = vmul.f32 %v213, 48.0
    %v232 = vsub.f32 %v230, %v231
    %v233 = vsel %vm186, %v232, 0.0
    %vm234 = vcmp.eq.s32.totalorder %v172, 0
    %v235 = vld [vmem:[#allocation7] sm:$0xff]
    %237 = vset.pattern.permute.xlu0 0
    %238 = vperm.xlu0 %237, %v233
    %v239 = vpop.permute.xlu0 %238
    %v241 = vsel %vm234, %v239, 0.0
    %v242 = vadd.f32 %v167, %v241
    %v243 = vadd.f32 %v235, %v242
    %244 = vst [vmem:[#allocation7] sm:$0xff] %v243
    // Predicated region
    $region26: #{tpu_custom_call.1} parent=1 // pred_check
      _
    $region27: #{tpu_custom_call.1} parent=1 // pred_check_branch
      %246 = sbr.rel (0) target = $region29
    $region28: #{tpu_custom_call.1} parent=1 // pred_region
      %s247 = sadd.s32 0, 0
      %249 = vsyncadd [#allocation6], 0
      %s250 = smul.addr %s247, 8
      %s251 = scalar_lea.hbm %s4, %s250
      %s253 = sshll.u32 [#allocation7], 4
      %s254 = int_to_ptr.vmem [resolvable:$true] %s253
      %s255 = sshll.u32 %s251, 4
      %s256 = int_to_ptr.hbm [resolvable:$true] %s255
      %258 = dma.vmem_to_hbm [thread:$0]  %s254, 128, %s256, [#allocation6]
    $region29: #{tpu_custom_call.1} parent=1 // pred_fallthru
      _
    // Predicated region
    $region30: #{tpu_custom_call.1} parent=1 // pred_check
      _
    $region31: #{tpu_custom_call.1} parent=1 // pred_check_branch
      %260 = sbr.rel (0) target = $region33
    $region32: #{tpu_custom_call.1} parent=1 // pred_region
      %262 = dma.done [#allocation6], 128
    $region33: #{tpu_custom_call.1} parent=1 // pred_fallthru
      _
    %263 = vsyncpa [#allocation5], 1
    %264 = vsyncpa [#allocation6], 1

</llo_original>
